<compile_context>
chip_gen: v7x
topology: tpu7x:2x2x1
jax: 0.10.0
libtpu: 0.0.40
codegen_flags: <defaults>
</compile_context>

<pallas_src>
import jax
import jax.numpy as jnp
from jax import lax
from jax.experimental import pallas as pl
from jax.experimental.pallas import tpu as pltpu

EPS = 1e-5
LANES = 128


def _fused_conv_pool_bn_relu_kernel(p_ref, w_ref, g_ref, b_ref, o_ref):
    # p_ref: (4, M, KPAD) bf16  im2col patches, leading dim = 2x2 pool tap (hp, wp)
    # w_ref: (KPAD, CPAD) bf16  flattened 3x3 conv weights (zero padded)
    # g_ref: (1, CPAD)    f32   BN gamma (zero padded)
    # b_ref: (1, CPAD)    f32   BN beta  (zero padded)
    # o_ref: (M, CPAD)    f32   M = N*Ho*Wo, rows ordered (n, ho, wo)
    M, _ = o_ref.shape
    w = w_ref[...]

    # --- 3x3 conv + 2x2/stride-2 max pool: 4 per-tap MXU matmuls (bf16 in,
    #     f32 acc) folded into a running elementwise maximum.  No (4M, C) temp.
    pooled = jnp.dot(p_ref[0], w, preferred_element_type=jnp.float32)   # (M, C)
    for t in range(1, 4):
        pooled = jnp.maximum(
            pooled, jnp.dot(p_ref[t], w, preferred_element_type=jnp.float32))

    # --- BatchNorm2d (training-mode batch stats, biased variance), folded into
    #     a per-channel scale/shift.  Centered variance (no cancellation).
    inv_m = 1.0 / M
    mean = jnp.sum(pooled, axis=0, keepdims=True) * inv_m               # (1, C)
    diff = pooled - mean                                                # (M, C)
    var = jnp.sum(diff * diff, axis=0, keepdims=True) * inv_m           # (1, C)
    scale = g_ref[...] * lax.rsqrt(var + EPS)                           # EUP rsqrt

    # --- affine + ReLU, lane-dense f32 store (last dim = 128) ---
    o_ref[...] = jnp.maximum(diff * scale + b_ref[...], 0.0)


def x_block_forward(x_nchw, w_oihw, gamma, beta):
    """Forward pass of module X. x_nchw: (N, Cin, H, W) -> (N, Cout, H//2, W//2)."""
    N, Cin, H, W = x_nchw.shape
    Cout = w_oihw.shape[0]
    Ho, Wo = H // 2, W // 2
    M = N * Ho * Wo
    K = 9 * Cin
    KPAD = ((K + 63) // 64) * 64                   # multiple of 16 (bf16 sublanes); 64 here
    CPAD = max(LANES, ((Cout + LANES - 1) // LANES) * LANES)

    # ----- wrapper-side layout plumbing (XLA), all in bf16, single relayout -----
    x_bf = x_nchw.astype(jnp.bfloat16)                                   # cast first
    x_pad = jnp.pad(x_bf, ((0, 0), (0, 0), (1, 1), (1, 1)))              # spatial pad
    # 9 conv taps concatenated along channels in NCHW -> K order = (kh, kw, cin)
    taps = [x_pad[:, :, dh:dh + H, dw:dw + W] for dh in range(3) for dw in range(3)]
    pat = jnp.concatenate(taps, axis=1)                                  # (N, K, H, W)
    # one relayout into pooled row order (hp, wp, n, ho, wo, k)
    pat = pat.reshape(N, K, Ho, 2, Wo, 2)
    pat = jnp.transpose(pat, (3, 5, 0, 2, 4, 1))                         # (2, 2, N, Ho, Wo, K)
    pat = pat.reshape(4, M, K)
    patches = jnp.pad(pat, ((0, 0), (0, 0), (0, KPAD - K)))              # (4, M, KPAD) bf16

    # conv weights: OIHW -> (kh, kw, cin, cout) -> (K, Cout), zero-pad, bf16
    w_flat = jnp.transpose(w_oihw, (2, 3, 1, 0)).astype(jnp.float32).reshape(K, Cout)
    w2 = jnp.pad(w_flat, ((0, KPAD - K), (0, CPAD - Cout))).astype(jnp.bfloat16)

    g2 = jnp.pad(gamma.astype(jnp.float32), (0, CPAD - Cout)).reshape(1, CPAD)
    b2 = jnp.pad(beta.astype(jnp.float32), (0, CPAD - Cout)).reshape(1, CPAD)

    # Single step, whole-array VMEM refs (no grid -> no double buffering).
    vmem_spec = pl.BlockSpec(memory_space=pltpu.MemorySpace.VMEM)
    out2d = pl.pallas_call(
        _fused_conv_pool_bn_relu_kernel,
        out_shape=jax.ShapeDtypeStruct((M, CPAD), jnp.float32),
        in_specs=[vmem_spec, vmem_spec, vmem_spec, vmem_spec],
        out_specs=vmem_spec,
        compiler_params=pltpu.CompilerParams(vmem_limit_bytes=32 * 1024 * 1024),
    )(patches, w2, g2, b2)

    # (M, CPAD) -> (N, Ho, Wo, Cout) -> NCHW
    out = out2d.reshape(N, Ho, Wo, CPAD)[:, :, :, :Cout]
    return jnp.transpose(out, (0, 3, 1, 2))


def _reference(x_nchw, w_oihw, gamma, beta, *, bf16_matmul_inputs=False):
    """Pure-JAX reference matching the PyTorch module (training-mode BN).

    With bf16_matmul_inputs=True the conv inputs are rounded to bf16 first,
    matching the rounding the TPU MXU applies to the kernel's matmul operands.
    """
    x = jnp.transpose(x_nchw, (0, 2, 3, 1)).astype(jnp.float32)
    w = jnp.transpose(w_oihw, (2, 3, 1, 0)).astype(jnp.float32)
    if bf16_matmul_inputs:
        x = x.astype(jnp.bfloat16).astype(jnp.float32)
        w = w.astype(jnp.bfloat16).astype(jnp.float32)
    conv = lax.conv_general_dilated(
        x, w, window_strides=(1, 1), padding="SAME",
        dimension_numbers=("NHWC", "HWIO", "NHWC"),
        precision=lax.Precision.HIGHEST,
    )
    pooled = lax.reduce_window(
        conv, -jnp.inf, lax.max, (1, 2, 2, 1), (1, 2, 2, 1), "VALID"
    )
    mean = pooled.mean(axis=(0, 1, 2), keepdims=True)
    var = ((pooled - mean) ** 2).mean(axis=(0, 1, 2), keepdims=True)
    y = (pooled - mean) * lax.rsqrt(var + EPS)
    y = y * gamma.reshape(1, 1, 1, -1) + beta.reshape(1, 1, 1, -1)
    y = jnp.maximum(y, 0.0)
    return jnp.transpose(y, (0, 3, 1, 2))


if __name__ == "__main__":
    in_channels, out_channels = 4, 8
    N, H, W = 2, 16, 16

    key = jax.random.PRNGKey(0)
    kx, kw = jax.random.split(key)
    x = jax.random.normal(kx, (N, in_channels, H, W), dtype=jnp.float32)
    # Conv2d weight (Cout, Cin, 3, 3), bias=False. Deterministic synthetic init.
    w = 0.1 * jax.random.normal(kw, (out_channels, in_channels, 3, 3), dtype=jnp.float32)
    # BatchNorm2d affine params (deterministic, slightly non-trivial).
    gamma = 1.0 + 0.1 * jnp.arange(out_channels, dtype=jnp.float32)
    beta = 0.05 * jnp.arange(out_channels, dtype=jnp.float32)

    out = jax.block_until_ready(x_block_forward(x, w, gamma, beta))
    assert out.shape == (N, out_channels, H // 2, W // 2), out.shape

    # Tight check vs. reference that uses the same bf16 MXU-input rounding.
    ref_bf16 = _reference(x, w, gamma, beta, bf16_matmul_inputs=True)
    assert jnp.allclose(out, ref_bf16, atol=2e-3, rtol=2e-3), \
        float(jnp.max(jnp.abs(out - ref_bf16)))

    # Sanity check vs. the full-f32 reference (gap bounded by bf16 input rounding
    # amplified by BN normalization) — intentional bf16-training precision contract.
    ref_f32 = _reference(x, w, gamma, beta, bf16_matmul_inputs=False)
    assert jnp.allclose(out, ref_f32, atol=1e-1, rtol=1e-1), \
        float(jnp.max(jnp.abs(out - ref_f32)))

    print("KERNEL_OK")
</pallas_src>

<mosaic_0001>
module attributes {stable_mosaic.version = 11 : i64} {
  func.func @_fused_conv_pool_bn_relu_kernel(%arg0: memref<4x128x64xbf16, #tpu.memory_space<vmem>>, %arg1: memref<64x128xbf16, #tpu.memory_space<vmem>>, %arg2: memref<1x128xf32, #tpu.memory_space<vmem>>, %arg3: memref<1x128xf32, #tpu.memory_space<vmem>>, %arg4: memref<128x128xf32, #tpu.memory_space<vmem>>) attributes {dimension_semantics = [], scalar_prefetch = 0 : i64, scratch_operands = 0 : i64, tpu.core_type = #tpu.core_type<tc>} {
    %c0 = arith.constant 0 : index
    %c0_0 = arith.constant 0 : index
    %0 = vector.load %arg1[%c0, %c0_0] : memref<64x128xbf16, #tpu.memory_space<vmem>>, vector<64x128xbf16>
    %c0_1 = arith.constant 0 : index
    %c0_2 = arith.constant 0 : index
    %c0_3 = arith.constant 0 : index
    %1 = vector.load %arg0[%c0_1, %c0_2, %c0_3] : memref<4x128x64xbf16, #tpu.memory_space<vmem>>, vector<1x128x64xbf16>
    %2 = vector.shape_cast %1 : vector<1x128x64xbf16> to vector<128x64xbf16>
    %cst = arith.constant dense<0.000000e+00> : vector<128x128xf32>
    %3 = tpu.matmul %2, %0, %cst {dimension_numbers = #tpu.dot_dimension_numbers<[1], [0], [0], [1], [0, 0, 1, 1], [], []>} : vector<128x64xbf16>, vector<64x128xbf16>, vector<128x128xf32> -> vector<128x128xf32>
    %c1 = arith.constant 1 : index
    %c0_4 = arith.constant 0 : index
    %c0_5 = arith.constant 0 : index
    %4 = vector.load %arg0[%c1, %c0_4, %c0_5] : memref<4x128x64xbf16, #tpu.memory_space<vmem>>, vector<1x128x64xbf16>
    %5 = vector.shape_cast %4 : vector<1x128x64xbf16> to vector<128x64xbf16>
    %cst_6 = arith.constant dense<0.000000e+00> : vector<128x128xf32>
    %6 = tpu.matmul %5, %0, %cst_6 {dimension_numbers = #tpu.dot_dimension_numbers<[1], [0], [0], [1], [0, 0, 1, 1], [], []>} : vector<128x64xbf16>, vector<64x128xbf16>, vector<128x128xf32> -> vector<128x128xf32>
    %7 = arith.maximumf %3, %6 : vector<128x128xf32>
    %c2 = arith.constant 2 : index
    %c0_7 = arith.constant 0 : index
    %c0_8 = arith.constant 0 : index
    %8 = vector.load %arg0[%c2, %c0_7, %c0_8] : memref<4x128x64xbf16, #tpu.memory_space<vmem>>, vector<1x128x64xbf16>
    %9 = vector.shape_cast %8 : vector<1x128x64xbf16> to vector<128x64xbf16>
    %cst_9 = arith.constant dense<0.000000e+00> : vector<128x128xf32>
    %10 = tpu.matmul %9, %0, %cst_9 {dimension_numbers = #tpu.dot_dimension_numbers<[1], [0], [0], [1], [0, 0, 1, 1], [], []>} : vector<128x64xbf16>, vector<64x128xbf16>, vector<128x128xf32> -> vector<128x128xf32>
    %11 = arith.maximumf %7, %10 : vector<128x128xf32>
    %c3 = arith.constant 3 : index
    %c0_10 = arith.constant 0 : index
    %c0_11 = arith.constant 0 : index
    %12 = vector.load %arg0[%c3, %c0_10, %c0_11] : memref<4x128x64xbf16, #tpu.memory_space<vmem>>, vector<1x128x64xbf16>
    %13 = vector.shape_cast %12 : vector<1x128x64xbf16> to vector<128x64xbf16>
    %cst_12 = arith.constant dense<0.000000e+00> : vector<128x128xf32>
    %14 = tpu.matmul %13, %0, %cst_12 {dimension_numbers = #tpu.dot_dimension_numbers<[1], [0], [0], [1], [0, 0, 1, 1], [], []>} : vector<128x64xbf16>, vector<64x128xbf16>, vector<128x128xf32> -> vector<128x128xf32>
    %15 = arith.maximumf %11, %14 : vector<128x128xf32>
    %cst_13 = arith.constant dense<0.000000e+00> : vector<128xf32>
    %16 = vector.multi_reduction <add>, %15, %cst_13 [0] : vector<128x128xf32> to vector<128xf32>
    %17 = vector.shape_cast %16 : vector<128xf32> to vector<1x128xf32>
    %cst_14 = arith.constant 7.812500e-03 : f32
    %18 = vector.broadcast %cst_14 : f32 to vector<1x128xf32>
    %19 = arith.mulf %17, %18 : vector<1x128xf32>
    %20 = vector.broadcast %19 : vector<1x128xf32> to vector<128x128xf32>
    %21 = arith.subf %15, %20 : vector<128x128xf32>
    %22 = arith.mulf %21, %21 : vector<128x128xf32>
    %cst_15 = arith.constant dense<0.000000e+00> : vector<128xf32>
    %23 = vector.multi_reduction <add>, %22, %cst_15 [0] : vector<128x128xf32> to vector<128xf32>
    %24 = vector.shape_cast %23 : vector<128xf32> to vector<1x128xf32>
    %cst_16 = arith.constant 7.812500e-03 : f32
    %25 = vector.broadcast %cst_16 : f32 to vector<1x128xf32>
    %26 = arith.mulf %24, %25 : vector<1x128xf32>
    %c0_17 = arith.constant 0 : index
    %c0_18 = arith.constant 0 : index
    %27 = vector.load %arg2[%c0_17, %c0_18] : memref<1x128xf32, #tpu.memory_space<vmem>>, vector<1x128xf32>
    %cst_19 = arith.constant 9.99999974E-6 : f32
    %28 = vector.broadcast %cst_19 : f32 to vector<1x128xf32>
    %29 = arith.addf %26, %28 : vector<1x128xf32>
    %30 = math.rsqrt %29 : vector<1x128xf32>
    %31 = arith.mulf %27, %30 : vector<1x128xf32>
    %32 = vector.broadcast %31 : vector<1x128xf32> to vector<128x128xf32>
    %33 = arith.mulf %21, %32 : vector<128x128xf32>
    %c0_20 = arith.constant 0 : index
    %c0_21 = arith.constant 0 : index
    %34 = vector.load %arg3[%c0_20, %c0_21] : memref<1x128xf32, #tpu.memory_space<vmem>>, vector<1x128xf32>
    %35 = vector.broadcast %34 : vector<1x128xf32> to vector<128x128xf32>
    %36 = arith.addf %33, %35 : vector<128x128xf32>
    %cst_22 = arith.constant 0.000000e+00 : f32
    %37 = vector.broadcast %cst_22 : f32 to vector<128x128xf32>
    %38 = arith.maximumf %36, %37 : vector<128x128xf32>
    %c0_23 = arith.constant 0 : index
    %c0_24 = arith.constant 0 : index
    %39 = vector.load %arg4[%c0_23, %c0_24] : memref<128x128xf32, #tpu.memory_space<vmem>>, vector<128x128xf32>
    tpu.vector_store %arg4[%c0_23, %c0_24], %38 {strides = array<i32>} : memref<128x128xf32, #tpu.memory_space<vmem>>, vector<128x128xf32>,
    return
  }
}

</mosaic_0001>

<llo_original>
// kernel: tpu_custom_call.1
$region0: #{tpu_custom_call.1}
  #allocation0 [shape = 'u32[]', space=smem, size = 0x4, offset = 0x4, fixed_abs, tag = 'smem constant byte address 0x4 - core index']
  #allocation1 [shape = 'u32[144,128]{1,0:T(1,128)}', space=vmem, size = 0x12000, scoped, tag = 'internal scratch']
  %s0 = inlined_call_operand.vmem [shape: bf16[4,128,64], index: 0, kind: input, shape index: {}]
  %s1 = inlined_call_operand.vmem [shape: bf16[64,128], index: 1, kind: input, shape index: {}]
  %s2 = inlined_call_operand.vmem [shape: f32[1,128], index: 2, kind: input, shape index: {}]
  %s3 = inlined_call_operand.vmem [shape: f32[1,128], index: 3, kind: input, shape index: {}]
  %s4 = inlined_call_operand.hbm [shape: f32[128,128], index: 4, kind: output, shape index: {}]
  %s5 = sld [smem:[#allocation0]]
  $region26: #{tpu_custom_call.1} parent=0
    _
  %s7 = ssub.s32 1, %s5
  %s8 = scalar_select 0, %s7, %s5
  $region1: #{tpu_custom_call.1} parent=0
    #allocation2 [shape = 'u8[65536]{0}', space=vmem, size = 0x10000, scoped, tag = 'output window, operand 0, single buffered']
    #allocation3 [shape = 's32[1]{0}', space=sflag, size = 0x4, scoped, tag = 'scoped memory for tpu_custom_call.1']
    %9 = vsyncpa [#allocation3], 0
    // Predicated region
    $region2: #{tpu_custom_call.1} parent=1 // pred_check
      _
    $region3: #{tpu_custom_call.1} parent=1 // pred_check_branch
      %11 = sbr.rel (0) target = $region5
    $region4: #{tpu_custom_call.1} parent=1 // pred_region
      _
    $region5: #{tpu_custom_call.1} parent=1 // pred_fallthru
      _
    // Predicated region
    $region6: #{tpu_custom_call.1} parent=1 // pred_check
      _
    $region7: #{tpu_custom_call.1} parent=1 // pred_check_branch
      %13 = sbr.rel (0) target = $region9
    $region8: #{tpu_custom_call.1} parent=1 // pred_region
      _
    $region9: #{tpu_custom_call.1} parent=1 // pred_fallthru
      _
    // Predicated region
    $region10: #{tpu_custom_call.1} parent=1 // pred_check
      _
    $region11: #{tpu_custom_call.1} parent=1 // pred_check_branch
      %15 = sbr.rel (0) target = $region13
    $region12: #{tpu_custom_call.1} parent=1 // pred_region
      _
    $region13: #{tpu_custom_call.1} parent=1 // pred_fallthru
      _
    // Predicated region
    $region14: #{tpu_custom_call.1} parent=1 // pred_check
      _
    $region15: #{tpu_custom_call.1} parent=1 // pred_check_branch
      %17 = sbr.rel (0) target = $region17
    $region16: #{tpu_custom_call.1} parent=1 // pred_region
      _
    $region17: #{tpu_custom_call.1} parent=1 // pred_fallthru
      _
    %v19 = vld [vmem:[%s1] sm:$0xf]
    %v20 = vld [vmem:[%s1 + $0x4] sm:$0xf]
    %v21 = vld [vmem:[%s1 + $0x8] sm:$0xf]
    %v22 = vld [vmem:[%s1 + $0xc] sm:$0xf]
    %v23 = vld [vmem:[%s1 + $0x10] sm:$0xf]
    %v24 = vld [vmem:[%s1 + $0x14] sm:$0xf]
    %v25 = vld [vmem:[%s1 + $0x18] sm:$0xf]
    %v26 = vld [vmem:[%s1 + $0x1c] sm:$0xf]
    %v27 = vld [vmem:[%s0] sm:$0xf]
    %v28 = vld [vmem:[%s0 + $0x4] sm:$0xf]
    %v29 = vld [vmem:[%s0 + $0x8] sm:$0xf]
    %v30 = vld [vmem:[%s0 + $0xc] sm:$0xf]
    %v31 = vld [vmem:[%s0 + $0x10] sm:$0xf]
    %v32 = vld [vmem:[%s0 + $0x14] sm:$0xf]
    %v33 = vld [vmem:[%s0 + $0x18] sm:$0xf]
    %v34 = vld [vmem:[%s0 + $0x1c] sm:$0xf]
    %v35 = vld [vmem:[%s0 + $0x20] sm:$0xf]
    %v36 = vld [vmem:[%s0 + $0x24] sm:$0xf]
    %v37 = vld [vmem:[%s0 + $0x28] sm:$0xf]
    %v38 = vld [vmem:[%s0 + $0x2c] sm:$0xf]
    %v39 = vld [vmem:[%s0 + $0x30] sm:$0xf]
    %v40 = vld [vmem:[%s0 + $0x34] sm:$0xf]
    %v41 = vld [vmem:[%s0 + $0x38] sm:$0xf]
    %v42 = vld [vmem:[%s0 + $0x3c] sm:$0xf]
    %v59 = vunpack.c.l.b16 %v27
    %v60 = vunpack.c.l.b16 %v28
    %v61 = vunpack.c.l.b16 %v29
    %v62 = vunpack.c.l.b16 %v30
    %v63 = vunpack.c.l.b16 %v31
    %v64 = vunpack.c.l.b16 %v32
    %v65 = vunpack.c.l.b16 %v33
    %v66 = vunpack.c.l.b16 %v34
    %v67 = vunpack.c.l.b16 %v35
    %v68 = vunpack.c.l.b16 %v36
    %v69 = vunpack.c.l.b16 %v37
    %v70 = vunpack.c.l.b16 %v38
    %v71 = vunpack.c.l.b16 %v39
    %v72 = vunpack.c.l.b16 %v40
    %v73 = vunpack.c.l.b16 %v41
    %v74 = vunpack.c.l.b16 %v42
    %v75 = vpack.c.b16 %v60, %v59
    %v76 = vpack.c.b16 %v62, %v61
    %v77 = vpack.c.b16 %v64, %v63
    %v78 = vpack.c.b16 %v66, %v65
    %v79 = vpack.c.b16 %v68, %v67
    %v80 = vpack.c.b16 %v70, %v69
    %v81 = vpack.c.b16 %v72, %v71
    %v82 = vpack.c.b16 %v74, %v73
    %v91 = vunpack.c.l.b16 %v19
    %v92 = vunpack.c.l.b16 %v20
    %v93 = vunpack.c.l.b16 %v21
    %v94 = vunpack.c.l.b16 %v22
    %v95 = vunpack.c.l.b16 %v23
    %v96 = vunpack.c.l.b16 %v24
    %v97 = vunpack.c.l.b16 %v25
    %v98 = vunpack.c.l.b16 %v26
    %v99 = vpack.c.b16 %v92, %v91
    %v100 = vpack.c.b16 %v94, %v93
    %v101 = vpack.c.b16 %v96, %v95
    %v102 = vpack.c.b16 %v98, %v97
    %vm107 = vcmask 523264
    %v109 = vsel %vm107, %v75, 0
    %v112 = vsel %vm107, %v76, 0
    %v115 = vsel %vm107, %v77, 0
    %v118 = vsel %vm107, %v78, 0
    %v121 = vsel %vm107, %v79, 0
    %v124 = vsel %vm107, %v80, 0
    %v127 = vsel %vm107, %v81, 0
    %v130 = vsel %vm107, %v82, 0
    %132 = vmatprep.subr.bf16.mxu0 0
    %133 = vmatpush1.bf16.msra.mxu0 %v99
    %134 = vmatprep.subr.bf16.mxu0 0
    %135 = vmatpush1.bf16.msra.mxu0 %v100
    %136 = vmatprep.subr.bf16.mxu0 0
    %137 = vmatpush1.bf16.msra.mxu0 %v101
    %138 = vmatprep.subr.bf16.mxu0 0
    %139 = vmatpush1.bf16.msra.mxu0 %v102
    %140 = vmatprep.subr.bf16.mxu0 0
    %141 = vmatpush1.bf16.msra.mxu0 0
    %142 = vmatprep.subr.bf16.mxu0 0
    %143 = vmatpush1.bf16.msra.mxu0 0
    %144 = vmatprep.subr.bf16.mxu0 0
    %145 = vmatpush1.bf16.msra.mxu0 0
    %146 = vmatprep.subr.bf16.mxu0 0
    %147 = vmatpush1.bf16.msra.mxu0 0
    %148 = vmatprep.subr.bf16.mxu0 0
    %149 = vmatpush1.bf16.msra.mxu0 0
    %150 = vmatprep.subr.bf16.mxu0 0
    %151 = vmatpush1.bf16.msra.mxu0 0
    %152 = vmatprep.subr.bf16.mxu0 0
    %153 = vmatpush1.bf16.msra.mxu0 0
    %154 = vmatprep.subr.bf16.mxu0 0
    %155 = vmatpush1.bf16.msra.mxu0 0
    %156 = vmatprep.subr.bf16.mxu0 0
    %157 = vmatpush1.bf16.msra.mxu0 0
    %158 = vmatprep.subr.bf16.mxu0 0
    %159 = vmatpush1.bf16.msra.mxu0 0
    %160 = vmatprep.subr.bf16.mxu0 0
    %161 = vmatpush1.bf16.msra.mxu0 0
    %162 = vmatprep.subr.bf16.mxu0 0
    %163 = vmatpush1.bf16.msra.mxu0 0
    %164 = vmatprep.mubr.bf16.mxu0 0
    %165 = vmatmul.mubr.bf16.gmra.mrb[0].mxu0 %v109
    %v166 = vpop.f32.mrb[0].mxu0
    %v167 = vadd.f32 0.0, %v166
    %v168 = vpop.f32.mrb[0].mxu0
    %v169 = vpop.f32.mrb[0].mxu0
    %v170 = vadd.f32 0.0, %v169
    %v171 = vpop.f32.mrb[0].mxu0
    %172 = vmatprep.mubr.bf16.mxu0 0
    %173 = vmatmul.mubr.bf16.gmra.mrb[0].mxu0 %v112
    %v174 = vpop.f32.mrb[0].mxu0
    %v175 = vadd.f32 0.0, %v174
    %v176 = vpop.f32.mrb[0].mxu0
    %v177 = vpop.f32.mrb[0].mxu0
    %v178 = vadd.f32 0.0, %v177
    %v179 = vpop.f32.mrb[0].mxu0
    %180 = vmatprep.mubr.bf16.mxu0 0
    %181 = vmatmul.mubr.bf16.gmra.mrb[0].mxu0 %v115
    %v182 = vpop.f32.mrb[0].mxu0
    %v183 = vadd.f32 0.0, %v182
    %v184 = vpop.f32.mrb[0].mxu0
    %v185 = vpop.f32.mrb[0].mxu0
    %v186 = vadd.f32 0.0, %v185
    %v187 = vpop.f32.mrb[0].mxu0
    %188 = vmatprep.mubr.bf16.mxu0 0
    %189 = vmatmul.mubr.bf16.gmra.mrb[0].mxu0 %v118
    %v190 = vpop.f32.mrb[0].mxu0
    %v191 = vadd.f32 0.0, %v190
    %v192 = vpop.f32.mrb[0].mxu0
    %v193 = vpop.f32.mrb[0].mxu0
    %v194 = vadd.f32 0.0, %v193
    %v195 = vpop.f32.mrb[0].mxu0
    %196 = vmatprep.mubr.bf16.mxu0 0
    %197 = vmatmul.mubr.bf16.gmra.mrb[0].mxu0 %v121
    %v198 = vpop.f32.mrb[0].mxu0
    %v199 = vadd.f32 0.0, %v198
    %v200 = vpop.f32.mrb[0].mxu0
    %v201 = vpop.f32.mrb[0].mxu0
    %v202 = vadd.f32 0.0, %v201
    %v203 = vpop.f32.mrb[0].mxu0
    %204 = vmatprep.mubr.bf16.mxu0 0
    %205 = vmatmul.mubr.bf16.gmra.mrb[0].mxu0 %v124
    %v206 = vpop.f32.mrb[0].mxu0
    %v207 = vadd.f32 0.0, %v206
    %v208 = vpop.f32.mrb[0].mxu0
    %v209 = vpop.f32.mrb[0].mxu0
    %v210 = vadd.f32 0.0, %v209
    %v211 = vpop.f32.mrb[0].mxu0
    %212 = vmatprep.mubr.bf16.mxu0 0
    %213 = vmatmul.mubr.bf16.gmra.mrb[0].mxu0 %v127
    %v214 = vpop.f32.mrb[0].mxu0
    %v215 = vadd.f32 0.0, %v214
    %v216 = vpop.f32.mrb[0].mxu0
    %v217 = vpop.f32.mrb[0].mxu0
    %v218 = vadd.f32 0.0, %v217
    %v219 = vpop.f32.mrb[0].mxu0
    %220 = vmatprep.mubr.bf16.mxu0 0
    %221 = vmatmul.mubr.bf16.gmra.mrb[0].mxu0 %v130
    %v222 = vpop.f32.mrb[0].mxu0
    %v223 = vadd.f32 0.0, %v222
    %v224 = vpop.f32.mrb[0].mxu0
    %v225 = vpop.f32.mrb[0].mxu0
    %v226 = vadd.f32 0.0, %v225
    %v227 = vpop.f32.mrb[0].mxu0
    %228 = vdwg.mxu0
    %s229 = scalar_lea.vmem %s0, 64
    %v230 = vld [vmem:[%s229] sm:$0xf]
    %v231 = vld [vmem:[%s229 + $0x4] sm:$0xf]
    %v232 = vld [vmem:[%s229 + $0x8] sm:$0xf]
    %v233 = vld [vmem:[%s229 + $0xc] sm:$0xf]
    %v234 = vld [vmem:[%s229 + $0x10] sm:$0xf]
    %v235 = vld [vmem:[%s229 + $0x14] sm:$0xf]
    %v236 = vld [vmem:[%s229 + $0x18] sm:$0xf]
    %v237 = vld [vmem:[%s229 + $0x1c] sm:$0xf]
    %v238 = vld [vmem:[%s229 + $0x20] sm:$0xf]
    %v239 = vld [vmem:[%s229 + $0x24] sm:$0xf]
    %v240 = vld [vmem:[%s229 + $0x28] sm:$0xf]
    %v241 = vld [vmem:[%s229 + $0x2c] sm:$0xf]
    %v242 = vld [vmem:[%s229 + $0x30] sm:$0xf]
    %v243 = vld [vmem:[%s229 + $0x34] sm:$0xf]
    %v244 = vld [vmem:[%s229 + $0x38] sm:$0xf]
    %v245 = vld [vmem:[%s229 + $0x3c] sm:$0xf]
    %v262 = vunpack.c.l.b16 %v230
    %v263 = vunpack.c.l.b16 %v231
    %v264 = vunpack.c.l.b16 %v232
    %v265 = vunpack.c.l.b16 %v233
    %v266 = vunpack.c.l.b16 %v234
    %v267 = vunpack.c.l.b16 %v235
    %v268 = vunpack.c.l.b16 %v236
    %v269 = vunpack.c.l.b16 %v237
    %v270 = vunpack.c.l.b16 %v238
    %v271 = vunpack.c.l.b16 %v239
    %v272 = vunpack.c.l.b16 %v240
    %v273 = vunpack.c.l.b16 %v241
    %v274 = vunpack.c.l.b16 %v242
    %v275 = vunpack.c.l.b16 %v243
    %v276 = vunpack.c.l.b16 %v244
    %v277 = vunpack.c.l.b16 %v245
    %v278 = vpack.c.b16 %v263, %v262
    %v279 = vpack.c.b16 %v265, %v264
    %v280 = vpack.c.b16 %v267, %v266
    %v281 = vpack.c.b16 %v269, %v268
    %v282 = vpack.c.b16 %v271, %v270
    %v283 = vpack.c.b16 %v273, %v272
    %v284 = vpack.c.b16 %v275, %v274
    %v285 = vpack.c.b16 %v277, %v276
    %v287 = vsel %vm107, %v278, 0
    %v290 = vsel %vm107, %v279, 0
    %v293 = vsel %vm107, %v280, 0
    %v296 = vsel %vm107, %v281, 0
    %v299 = vsel %vm107, %v282, 0
    %v302 = vsel %vm107, %v283, 0
    %v305 = vsel %vm107, %v284, 0
    %v308 = vsel %vm107, %v285, 0
    %310 = vmatprep.subr.bf16.mxu0 0
    %311 = vmatpush1.bf16.msra.mxu0 %v99
    %312 = vmatprep.subr.bf16.mxu0 0
    %313 = vmatpush1.bf16.msra.mxu0 %v100
    %314 = vmatprep.subr.bf16.mxu0 0
    %315 = vmatpush1.bf16.msra.mxu0 %v101
    %316 = vmatprep.subr.bf16.mxu0 0
    %317 = vmatpush1.bf16.msra.mxu0 %v102
    %318 = vmatprep.subr.bf16.mxu0 0
    %319 = vmatpush1.bf16.msra.mxu0 0
    %320 = vmatprep.subr.bf16.mxu0 0
    %321 = vmatpush1.bf16.msra.mxu0 0
    %322 = vmatprep.subr.bf16.mxu0 0
    %323 = vmatpush1.bf16.msra.mxu0 0
    %324 = vmatprep.subr.bf16.mxu0 0
    %325 = vmatpush1.bf16.msra.mxu0 0
    %326 = vmatprep.subr.bf16.mxu0 0
    %327 = vmatpush1.bf16.msra.mxu0 0
    %328 = vmatprep.subr.bf16.mxu0 0
    %329 = vmatpush1.bf16.msra.mxu0 0
    %330 = vmatprep.subr.bf16.mxu0 0
    %331 = vmatpush1.bf16.msra.mxu0 0
    %332 = vmatprep.subr.bf16.mxu0 0
    %333 = vmatpush1.bf16.msra.mxu0 0
    %334 = vmatprep.subr.bf16.mxu0 0
    %335 = vmatpush1.bf16.msra.mxu0 0
    %336 = vmatprep.subr.bf16.mxu0 0
    %337 = vmatpush1.bf16.msra.mxu0 0
    %338 = vmatprep.subr.bf16.mxu0 0
    %339 = vmatpush1.bf16.msra.mxu0 0
    %340 = vmatprep.subr.bf16.mxu0 0
    %341 = vmatpush1.bf16.msra.mxu0 0
    %342 = vmatprep.mubr.bf16.mxu0 0
    %343 = vmatmul.mubr.bf16.gmra.mrb[0].mxu0 %v287
    %v344 = vpop.f32.mrb[0].mxu0
    %v345 = vadd.f32 0.0, %v344
    %v346 = vpop.f32.mrb[0].mxu0
    %v347 = vpop.f32.mrb[0].mxu0
    %v348 = vadd.f32 0.0, %v347
    %v349 = vpop.f32.mrb[0].mxu0
    %350 = vmatprep.mubr.bf16.mxu0 0
    %351 = vmatmul.mubr.bf16.gmra.mrb[0].mxu0 %v290
    %v352 = vpop.f32.mrb[0].mxu0
    %v353 = vadd.f32 0.0, %v352
    %v354 = vpop.f32.mrb[0].mxu0
    %v355 = vpop.f32.mrb[0].mxu0
    %v356 = vadd.f32 0.0, %v355
    %v357 = vpop.f32.mrb[0].mxu0
    %358 = vmatprep.mubr.bf16.mxu0 0
    %359 = vmatmul.mubr.bf16.gmra.mrb[0].mxu0 %v293
    %v360 = vpop.f32.mrb[0].mxu0
    %v361 = vadd.f32 0.0, %v360
    %v362 = vpop.f32.mrb[0].mxu0
    %v363 = vpop.f32.mrb[0].mxu0
    %v364 = vadd.f32 0.0, %v363
    %v365 = vpop.f32.mrb[0].mxu0
    %366 = vmatprep.mubr.bf16.mxu0 0
    %367 = vmatmul.mubr.bf16.gmra.mrb[0].mxu0 %v296
    %v368 = vpop.f32.mrb[0].mxu0
    %v369 = vadd.f32 0.0, %v368
    %v370 = vpop.f32.mrb[0].mxu0
    %v371 = vpop.f32.mrb[0].mxu0
    %v372 = vadd.f32 0.0, %v371
    %v373 = vpop.f32.mrb[0].mxu0
    %374 = vmatprep.mubr.bf16.mxu0 0
    %375 = vmatmul.mubr.bf16.gmra.mrb[0].mxu0 %v299
    %v376 = vpop.f32.mrb[0].mxu0
    %v377 = vadd.f32 0.0, %v376
    %v378 = vpop.f32.mrb[0].mxu0
    %v379 = vpop.f32.mrb[0].mxu0
    %v380 = vadd.f32 0.0, %v379
    %v381 = vpop.f32.mrb[0].mxu0
    %382 = vmatprep.mubr.bf16.mxu0 0
    %383 = vmatmul.mubr.bf16.gmra.mrb[0].mxu0 %v302
    %v384 = vpop.f32.mrb[0].mxu0
    %v385 = vadd.f32 0.0, %v384
    %v386 = vpop.f32.mrb[0].mxu0
    %v387 = vpop.f32.mrb[0].mxu0
    %v388 = vadd.f32 0.0, %v387
    %v389 = vpop.f32.mrb[0].mxu0
    %390 = vmatprep.mubr.bf16.mxu0 0
    %391 = vmatmul.mubr.bf16.gmra.mrb[0].mxu0 %v305
    %v392 = vpop.f32.mrb[0].mxu0
    %v393 = vadd.f32 0.0, %v392
    %v394 = vpop.f32.mrb[0].mxu0
    %v395 = vpop.f32.mrb[0].mxu0
    %v396 = vadd.f32 0.0, %v395
    %v397 = vpop.f32.mrb[0].mxu0
    %398 = vmatprep.mubr.bf16.mxu0 0
    %399 = vmatmul.mubr.bf16.gmra.mrb[0].mxu0 %v308
    %v400 = vpop.f32.mrb[0].mxu0
    %v401 = vadd.f32 0.0, %v400
    %v402 = vpop.f32.mrb[0].mxu0
    %v403 = vpop.f32.mrb[0].mxu0
    %v404 = vadd.f32 0.0, %v403
    %v405 = vpop.f32.mrb[0].mxu0
    %406 = vdwg.mxu0
    %v407 = vmax.f32 %v167, %v345
    %v408 = vmax.f32 %v170, %v348
    %v409 = vmax.f32 %v175, %v353
    %v410 = vmax.f32 %v178, %v356
    %v411 = vmax.f32 %v183, %v361
    %v412 = vmax.f32 %v186, %v364
    %v413 = vmax.f32 %v191, %v369
    %v414 = vmax.f32 %v194, %v372
    %v415 = vmax.f32 %v199, %v377
    %v416 = vmax.f32 %v202, %v380
    %v417 = vmax.f32 %v207, %v385
    %v418 = vmax.f32 %v210, %v388
    %v419 = vmax.f32 %v215, %v393
    %v420 = vmax.f32 %v218, %v396
    %v421 = vmax.f32 %v223, %v401
    %v422 = vmax.f32 %v226, %v404
    %s423 = scalar_lea.vmem %s0, 128
    %v424 = vld [vmem:[%s423] sm:$0xf]
    %v425 = vld [vmem:[%s423 + $0x4] sm:$0xf]
    %v426 = vld [vmem:[%s423 + $0x8] sm:$0xf]
    %v427 = vld [vmem:[%s423 + $0xc] sm:$0xf]
    %v428 = vld [vmem:[%s423 + $0x10] sm:$0xf]
    %v429 = vld [vmem:[%s423 + $0x14] sm:$0xf]
    %v430 = vld [vmem:[%s423 + $0x18] sm:$0xf]
    %v431 = vld [vmem:[%s423 + $0x1c] sm:$0xf]
    %v432 = vld [vmem:[%s423 + $0x20] sm:$0xf]
    %v433 = vld [vmem:[%s423 + $0x24] sm:$0xf]
    %v434 = vld [vmem:[%s423 + $0x28] sm:$0xf]
    %v435 = vld [vmem:[%s423 + $0x2c] sm:$0xf]
    %v436 = vld [vmem:[%s423 + $0x30] sm:$0xf]
    %v437 = vld [vmem:[%s423 + $0x34] sm:$0xf]
    %v438 = vld [vmem:[%s423 + $0x38] sm:$0xf]
    %v439 = vld [vmem:[%s423 + $0x3c] sm:$0xf]
    %v456 = vunpack.c.l.b16 %v424
    %v457 = vunpack.c.l.b16 %v425
    %v458 = vunpack.c.l.b16 %v426
    %v459 = vunpack.c.l.b16 %v427
    %v460 = vunpack.c.l.b16 %v428
    %v461 = vunpack.c.l.b16 %v429
    %v462 = vunpack.c.l.b16 %v430
    %v463 = vunpack.c.l.b16 %v431
    %v464 = vunpack.c.l.b16 %v432
    %v465 = vunpack.c.l.b16 %v433
    %v466 = vunpack.c.l.b16 %v434
    %v467 = vunpack.c.l.b16 %v435
    %v468 = vunpack.c.l.b16 %v436
    %v469 = vunpack.c.l.b16 %v437
    %v470 = vunpack.c.l.b16 %v438
    %v471 = vunpack.c.l.b16 %v439
    %v472 = vpack.c.b16 %v457, %v456
    %v473 = vpack.c.b16 %v459, %v458
    %v474 = vpack.c.b16 %v461, %v460
    %v475 = vpack.c.b16 %v463, %v462
    %v476 = vpack.c.b16 %v465, %v464
    %v477 = vpack.c.b16 %v467, %v466
    %v478 = vpack.c.b16 %v469, %v468
    %v479 = vpack.c.b16 %v471, %v470
    %v481 = vsel %vm107, %v472, 0
    %v484 = vsel %vm107, %v473, 0
    %v487 = vsel %vm107, %v474, 0
    %v490 = vsel %vm107, %v475, 0
    %v493 = vsel %vm107, %v476, 0
    %v496 = vsel %vm107, %v477, 0
    %v499 = vsel %vm107, %v478, 0
    %v502 = vsel %vm107, %v479, 0
    %504 = vmatprep.subr.bf16.mxu0 0
    %505 = vmatpush1.bf16.msra.mxu0 %v99
    %506 = vmatprep.subr.bf16.mxu0 0
    %507 = vmatpush1.bf16.msra.mxu0 %v100
    %508 = vmatprep.subr.bf16.mxu0 0
    %509 = vmatpush1.bf16.msra.mxu0 %v101
    %510 = vmatprep.subr.bf16.mxu0 0
    %511 = vmatpush1.bf16.msra.mxu0 %v102
    %512 = vmatprep.subr.bf16.mxu0 0
    %513 = vmatpush1.bf16.msra.mxu0 0
    %514 = vmatprep.subr.bf16.mxu0 0
    %515 = vmatpush1.bf16.msra.mxu0 0
    %516 = vmatprep.subr.bf16.mxu0 0
    %517 = vmatpush1.bf16.msra.mxu0 0
    %518 = vmatprep.subr.bf16.mxu0 0
    %519 = vmatpush1.bf16.msra.mxu0 0
    %520 = vmatprep.subr.bf16.mxu0 0
    %521 = vmatpush1.bf16.msra.mxu0 0
    %522 = vmatprep.subr.bf16.mxu0 0
    %523 = vmatpush1.bf16.msra.mxu0 0
    %524 = vmatprep.subr.bf16.mxu0 0
    %525 = vmatpush1.bf16.msra.mxu0 0
    %526 = vmatprep.subr.bf16.mxu0 0
    %527 = vmatpush1.bf16.msra.mxu0 0
    %528 = vmatprep.subr.bf16.mxu0 0
    %529 = vmatpush1.bf16.msra.mxu0 0
    %530 = vmatprep.subr.bf16.mxu0 0
    %531 = vmatpush1.bf16.msra.mxu0 0
    %532 = vmatprep.subr.bf16.mxu0 0
    %533 = vmatpush1.bf16.msra.mxu0 0
    %534 = vmatprep.subr.bf16.mxu0 0
    %535 = vmatpush1.bf16.msra.mxu0 0
    %536 = vmatprep.mubr.bf16.mxu0 0
    %537 = vmatmul.mubr.bf16.gmra.mrb[0].mxu0 %v481
    %v538 = vpop.f32.mrb[0].mxu0
    %v539 = vadd.f32 0.0, %v538
    %v540 = vpop.f32.mrb[0].mxu0
    %v541 = vpop.f32.mrb[0].mxu0
    %v542 = vadd.f32 0.0, %v541
    %v543 = vpop.f32.mrb[0].mxu0
    %544 = vmatprep.mubr.bf16.mxu0 0
    %545 = vmatmul.mubr.bf16.gmra.mrb[0].mxu0 %v484
    %v546 = vpop.f32.mrb[0].mxu0
    %v547 = vadd.f32 0.0, %v546
    %v548 = vpop.f32.mrb[0].mxu0
    %v549 = vpop.f32.mrb[0].mxu0
    %v550 = vadd.f32 0.0, %v549
    %v551 = vpop.f32.mrb[0].mxu0
    %552 = vmatprep.mubr.bf16.mxu0 0
    %553 = vmatmul.mubr.bf16.gmra.mrb[0].mxu0 %v487
    %v554 = vpop.f32.mrb[0].mxu0
    %v555 = vadd.f32 0.0, %v554
    %v556 = vpop.f32.mrb[0].mxu0
    %v557 = vpop.f32.mrb[0].mxu0
    %v558 = vadd.f32 0.0, %v557
    %v559 = vpop.f32.mrb[0].mxu0
    %560 = vmatprep.mubr.bf16.mxu0 0
    %561 = vmatmul.mubr.bf16.gmra.mrb[0].mxu0 %v490
    %v562 = vpop.f32.mrb[0].mxu0
    %v563 = vadd.f32 0.0, %v562
    %v564 = vpop.f32.mrb[0].mxu0
    %v565 = vpop.f32.mrb[0].mxu0
    %v566 = vadd.f32 0.0, %v565
    %v567 = vpop.f32.mrb[0].mxu0
    %568 = vmatprep.mubr.bf16.mxu0 0
    %569 = vmatmul.mubr.bf16.gmra.mrb[0].mxu0 %v493
    %v570 = vpop.f32.mrb[0].mxu0
    %v571 = vadd.f32 0.0, %v570
    %v572 = vpop.f32.mrb[0].mxu0
    %v573 = vpop.f32.mrb[0].mxu0
    %v574 = vadd.f32 0.0, %v573
    %v575 = vpop.f32.mrb[0].mxu0
    %576 = vmatprep.mubr.bf16.mxu0 0
    %577 = vmatmul.mubr.bf16.gmra.mrb[0].mxu0 %v496
    %v578 = vpop.f32.mrb[0].mxu0
    %v579 = vadd.f32 0.0, %v578
    %v580 = vpop.f32.mrb[0].mxu0
    %v581 = vpop.f32.mrb[0].mxu0
    %v582 = vadd.f32 0.0, %v581
    %v583 = vpop.f32.mrb[0].mxu0
    %584 = vmatprep.mubr.bf16.mxu0 0
    %585 = vmatmul.mubr.bf16.gmra.mrb[0].mxu0 %v499
    %v586 = vpop.f32.mrb[0].mxu0
    %v587 = vadd.f32 0.0, %v586
    %v588 = vpop.f32.mrb[0].mxu0
    %v589 = vpop.f32.mrb[0].mxu0
    %v590 = vadd.f32 0.0, %v589
    %v591 = vpop.f32.mrb[0].mxu0
    %592 = vmatprep.mubr.bf16.mxu0 0
    %593 = vmatmul.mubr.bf16.gmra.mrb[0].mxu0 %v502
    %v594 = vpop.f32.mrb[0].mxu0
    %v595 = vadd.f32 0.0, %v594
    %v596 = vpop.f32.mrb[0].mxu0
    %v597 = vpop.f32.mrb[0].mxu0
    %v598 = vadd.f32 0.0, %v597
    %v599 = vpop.f32.mrb[0].mxu0
    %600 = vdwg.mxu0
    %v601 = vmax.f32 %v407, %v539
    %v602 = vmax.f32 %v408, %v542
    %v603 = vmax.f32 %v409, %v547
    %v604 = vmax.f32 %v410, %v550
    %v605 = vmax.f32 %v411, %v555
    %v606 = vmax.f32 %v412, %v558
    %v607 = vmax.f32 %v413, %v563
    %v608 = vmax.f32 %v414, %v566
    %v609 = vmax.f32 %v415, %v571
    %v610 = vmax.f32 %v416, %v574
    %v611 = vmax.f32 %v417, %v579
    %v612 = vmax.f32 %v418, %v582
    %v613 = vmax.f32 %v419, %v587
    %v614 = vmax.f32 %v420, %v590
    %v615 = vmax.f32 %v421, %v595
    %v616 = vmax.f32 %v422, %v598
    %s617 = scalar_lea.vmem %s0, 192
    %v618 = vld [vmem:[%s617] sm:$0xf]
    %v619 = vld [vmem:[%s617 + $0x4] sm:$0xf]
    %v620 = vld [vmem:[%s617 + $0x8] sm:$0xf]
    %v621 = vld [vmem:[%s617 + $0xc] sm:$0xf]
    %v622 = vld [vmem:[%s617 + $0x10] sm:$0xf]
    %v623 = vld [vmem:[%s617 + $0x14] sm:$0xf]
    %v624 = vld [vmem:[%s617 + $0x18] sm:$0xf]
    %v625 = vld [vmem:[%s617 + $0x1c] sm:$0xf]
    %v626 = vld [vmem:[%s617 + $0x20] sm:$0xf]
    %v627 = vld [vmem:[%s617 + $0x24] sm:$0xf]
    %v628 = vld [vmem:[%s617 + $0x28] sm:$0xf]
    %v629 = vld [vmem:[%s617 + $0x2c] sm:$0xf]
    %v630 = vld [vmem:[%s617 + $0x30] sm:$0xf]
    %v631 = vld [vmem:[%s617 + $0x34] sm:$0xf]
    %v632 = vld [vmem:[%s617 + $0x38] sm:$0xf]
    %v633 = vld [vmem:[%s617 + $0x3c] sm:$0xf]
    %v650 = vunpack.c.l.b16 %v618
    %v651 = vunpack.c.l.b16 %v619
    %v652 = vunpack.c.l.b16 %v620
    %v653 = vunpack.c.l.b16 %v621
    %v654 = vunpack.c.l.b16 %v622
    %v655 = vunpack.c.l.b16 %v623
    %v656 = vunpack.c.l.b16 %v624
    %v657 = vunpack.c.l.b16 %v625
    %v658 = vunpack.c.l.b16 %v626
    %v659 = vunpack.c.l.b16 %v627
    %v660 = vunpack.c.l.b16 %v628
    %v661 = vunpack.c.l.b16 %v629
    %v662 = vunpack.c.l.b16 %v630
    %v663 = vunpack.c.l.b16 %v631
    %v664 = vunpack.c.l.b16 %v632
    %v665 = vunpack.c.l.b16 %v633
    %v666 = vpack.c.b16 %v651, %v650
    %v667 = vpack.c.b16 %v653, %v652
    %v668 = vpack.c.b16 %v655, %v654
    %v669 = vpack.c.b16 %v657, %v656
    %v670 = vpack.c.b16 %v659, %v658
    %v671 = vpack.c.b16 %v661, %v660
    %v672 = vpack.c.b16 %v663, %v662
    %v673 = vpack.c.b16 %v665, %v664
    %v675 = vsel %vm107, %v666, 0
    %v678 = vsel %vm107, %v667, 0
    %v681 = vsel %vm107, %v668, 0
    %v684 = vsel %vm107, %v669, 0
    %v687 = vsel %vm107, %v670, 0
    %v690 = vsel %vm107, %v671, 0
    %v693 = vsel %vm107, %v672, 0
    %v696 = vsel %vm107, %v673, 0
    %698 = vmatprep.subr.bf16.mxu0 0
    %699 = vmatpush1.bf16.msra.mxu0 %v99
    %700 = vmatprep.subr.bf16.mxu0 0
    %701 = vmatpush1.bf16.msra.mxu0 %v100
    %702 = vmatprep.subr.bf16.mxu0 0
    %703 = vmatpush1.bf16.msra.mxu0 %v101
    %704 = vmatprep.subr.bf16.mxu0 0
    %705 = vmatpush1.bf16.msra.mxu0 %v102
    %706 = vmatprep.subr.bf16.mxu0 0
    %707 = vmatpush1.bf16.msra.mxu0 0
    %708 = vmatprep.subr.bf16.mxu0 0
    %709 = vmatpush1.bf16.msra.mxu0 0
    %710 = vmatprep.subr.bf16.mxu0 0
    %711 = vmatpush1.bf16.msra.mxu0 0
    %712 = vmatprep.subr.bf16.mxu0 0
    %713 = vmatpush1.bf16.msra.mxu0 0
    %714 = vmatprep.subr.bf16.mxu0 0
    %715 = vmatpush1.bf16.msra.mxu0 0
    %716 = vmatprep.subr.bf16.mxu0 0
    %717 = vmatpush1.bf16.msra.mxu0 0
    %718 = vmatprep.subr.bf16.mxu0 0
    %719 = vmatpush1.bf16.msra.mxu0 0
    %720 = vmatprep.subr.bf16.mxu0 0
    %721 = vmatpush1.bf16.msra.mxu0 0
    %722 = vmatprep.subr.bf16.mxu0 0
    %723 = vmatpush1.bf16.msra.mxu0 0
    %724 = vmatprep.subr.bf16.mxu0 0
    %725 = vmatpush1.bf16.msra.mxu0 0
    %726 = vmatprep.subr.bf16.mxu0 0
    %727 = vmatpush1.bf16.msra.mxu0 0
    %728 = vmatprep.subr.bf16.mxu0 0
    %729 = vmatpush1.bf16.msra.mxu0 0
    %730 = vmatprep.mubr.bf16.mxu0 0
    %731 = vmatmul.mubr.bf16.gmra.mrb[0].mxu0 %v675
    %v732 = vpop.f32.mrb[0].mxu0
    %v733 = vadd.f32 0.0, %v732
    %v734 = vpop.f32.mrb[0].mxu0
    %v735 = vpop.f32.mrb[0].mxu0
    %v736 = vadd.f32 0.0, %v735
    %v737 = vpop.f32.mrb[0].mxu0
    %738 = vmatprep.mubr.bf16.mxu0 0
    %739 = vmatmul.mubr.bf16.gmra.mrb[0].mxu0 %v678
    %v740 = vpop.f32.mrb[0].mxu0
    %v741 = vadd.f32 0.0, %v740
    %v742 = vpop.f32.mrb[0].mxu0
    %v743 = vpop.f32.mrb[0].mxu0
    %v744 = vadd.f32 0.0, %v743
    %v745 = vpop.f32.mrb[0].mxu0
    %746 = vmatprep.mubr.bf16.mxu0 0
    %747 = vmatmul.mubr.bf16.gmra.mrb[0].mxu0 %v681
    %v748 = vpop.f32.mrb[0].mxu0
    %v749 = vadd.f32 0.0, %v748
    %v750 = vpop.f32.mrb[0].mxu0
    %v751 = vpop.f32.mrb[0].mxu0
    %v752 = vadd.f32 0.0, %v751
    %v753 = vpop.f32.mrb[0].mxu0
    %754 = vmatprep.mubr.bf16.mxu0 0
    %755 = vmatmul.mubr.bf16.gmra.mrb[0].mxu0 %v684
    %v756 = vpop.f32.mrb[0].mxu0
    %v757 = vadd.f32 0.0, %v756
    %v758 = vpop.f32.mrb[0].mxu0
    %v759 = vpop.f32.mrb[0].mxu0
    %v760 = vadd.f32 0.0, %v759
    %v761 = vpop.f32.mrb[0].mxu0
    %762 = vmatprep.mubr.bf16.mxu0 0
    %763 = vmatmul.mubr.bf16.gmra.mrb[0].mxu0 %v687
    %v764 = vpop.f32.mrb[0].mxu0
    %v765 = vadd.f32 0.0, %v764
    %v766 = vpop.f32.mrb[0].mxu0
    %v767 = vpop.f32.mrb[0].mxu0
    %v768 = vadd.f32 0.0, %v767
    %v769 = vpop.f32.mrb[0].mxu0
    %770 = vmatprep.mubr.bf16.mxu0 0
    %771 = vmatmul.mubr.bf16.gmra.mrb[0].mxu0 %v690
    %v772 = vpop.f32.mrb[0].mxu0
    %v773 = vadd.f32 0.0, %v772
    %v774 = vpop.f32.mrb[0].mxu0
    %v775 = vpop.f32.mrb[0].mxu0
    %v776 = vadd.f32 0.0, %v775
    %v777 = vpop.f32.mrb[0].mxu0
    %778 = vmatprep.mubr.bf16.mxu0 0
    %779 = vmatmul.mubr.bf16.gmra.mrb[0].mxu0 %v693
    %v780 = vpop.f32.mrb[0].mxu0
    %v781 = vadd.f32 0.0, %v780
    %v782 = vpop.f32.mrb[0].mxu0
    %v783 = vpop.f32.mrb[0].mxu0
    %v784 = vadd.f32 0.0, %v783
    %v785 = vpop.f32.mrb[0].mxu0
    %786 = vmatprep.mubr.bf16.mxu0 0
    %787 = vmatmul.mubr.bf16.gmra.mrb[0].mxu0 %v696
    %v788 = vpop.f32.mrb[0].mxu0
    %v789 = vadd.f32 0.0, %v788
    %v790 = vpop.f32.mrb[0].mxu0
    %v791 = vpop.f32.mrb[0].mxu0
    %v792 = vadd.f32 0.0, %v791
    %v793 = vpop.f32.mrb[0].mxu0
    %794 = vdwg.mxu0
    %v795 = vmax.f32 %v601, %v733
    %v796 = vmax.f32 %v602, %v736
    %v797 = vmax.f32 %v603, %v741
    %v798 = vmax.f32 %v604, %v744
    %v799 = vmax.f32 %v605, %v749
    %v800 = vmax.f32 %v606, %v752
    %v801 = vmax.f32 %v607, %v757
    %v802 = vmax.f32 %v608, %v760
    %v803 = vmax.f32 %v609, %v765
    %v804 = vmax.f32 %v610, %v768
    %v805 = vmax.f32 %v611, %v773
    %v806 = vmax.f32 %v612, %v776
    %v807 = vmax.f32 %v613, %v781
    %v808 = vmax.f32 %v614, %v784
    %v809 = vmax.f32 %v615, %v789
    %v810 = vmax.f32 %v616, %v792
    %v811 = vadd.f32 %v795, %v796
    %v812 = vadd.f32 %v811, %v797
    %v813 = vadd.f32 %v812, %v798
    %v814 = vadd.f32 %v813, %v799
    %v815 = vadd.f32 %v814, %v800
    %v816 = vadd.f32 %v815, %v801
    %v817 = vadd.f32 %v816, %v802
    %v818 = vadd.f32 %v817, %v803
    %v819 = vadd.f32 %v818, %v804
    %v820 = vadd.f32 %v819, %v805
    %v821 = vadd.f32 %v820, %v806
    %v822 = vadd.f32 %v821, %v807
    %v823 = vadd.f32 %v822, %v808
    %v824 = vadd.f32 %v823, %v809
    %v825 = vadd.f32 %v824, %v810
    %v826 = vrot.slane %v825, 4
    %v827 = vadd.f32 %v825, %v826
    %v828 = vrot.slane %v827, 2
    %v829 = vadd.f32 %v827, %v828
    %v830 = vrot.slane %v829, 1
    %v831 = vadd.f32 %v829, %v830
    %v832 = vmul.f32 %v831, 0.0078125
    %v833 = vsub.f32 %v795, %v832
    %v834 = vsub.f32 %v796, %v832
    %v835 = vsub.f32 %v797, %v832
    %v836 = vsub.f32 %v798, %v832
    %v837 = vsub.f32 %v799, %v832
    %v838 = vsub.f32 %v800, %v832
    %v839 = vsub.f32 %v801, %v832
    %v840 = vsub.f32 %v802, %v832
    %v841 = vsub.f32 %v803, %v832
    %v842 = vsub.f32 %v804, %v832
    %v843 = vsub.f32 %v805, %v832
    %v844 = vsub.f32 %v806, %v832
    %v845 = vsub.f32 %v807, %v832
    %v846 = vsub.f32 %v808, %v832
    %v847 = vsub.f32 %v809, %v832
    %v848 = vsub.f32 %v810, %v832
    %v849 = vmul.f32 %v833, %v833
    %v850 = vmul.f32 %v834, %v834
    %v851 = vmul.f32 %v835, %v835
    %v852 = vmul.f32 %v836, %v836
    %v853 = vmul.f32 %v837, %v837
    %v854 = vmul.f32 %v838, %v838
    %v855 = vmul.f32 %v839, %v839
    %v856 = vmul.f32 %v840, %v840
    %v857 = vmul.f32 %v841, %v841
    %v858 = vmul.f32 %v842, %v842
    %v859 = vmul.f32 %v843, %v843
    %v860 = vmul.f32 %v844, %v844
    %v861 = vmul.f32 %v845, %v845
    %v862 = vmul.f32 %v846, %v846
    %v863 = vmul.f32 %v847, %v847
    %v864 = vmul.f32 %v848, %v848
    %v865 = vadd.f32 %v849, %v850
    %v866 = vadd.f32 %v865, %v851
    %v867 = vadd.f32 %v866, %v852
    %v868 = vadd.f32 %v867, %v853
    %v869 = vadd.f32 %v868, %v854
    %v870 = vadd.f32 %v869, %v855
    %v871 = vadd.f32 %v870, %v856
    %v872 = vadd.f32 %v871, %v857
    %v873 = vadd.f32 %v872, %v858
    %v874 = vadd.f32 %v873, %v859
    %v875 = vadd.f32 %v874, %v860
    %v876 = vadd.f32 %v875, %v861
    %v877 = vadd.f32 %v876, %v862
    %v878 = vadd.f32 %v877, %v863
    %v879 = vadd.f32 %v878, %v864
    %v880 = vrot.slane %v879, 4
    %v881 = vadd.f32 %v879, %v880
    %v882 = vrot.slane %v881, 2
    %v883 = vadd.f32 %v881, %v882
    %v884 = vrot.slane %v883, 1
    %v885 = vadd.f32 %v883, %v884
    %v886 = vmul.f32 %v885, 0.0078125
    %v887 = vld [vmem:[%s2] sm:$0x1]
    %v888 = vadd.f32 %v886, 1e-05
    %v889 = vrsqrt.pop %v888
    %v890 = vmul.f32 %v887, %v889
    %v892 = vlaneseq
    %v893 = vshrl.u32 %v892, 7
    %v894 = vsub.s32 0, %v893
    %v895 = vrot.slane %v890, %v894
    %v897 = vmul.f32 %v833, %v895
    %v898 = vmul.f32 %v834, %v895
    %v899 = vmul.f32 %v835, %v895
    %v900 = vmul.f32 %v836, %v895
    %v901 = vmul.f32 %v837, %v895
    %v902 = vmul.f32 %v838, %v895
    %v903 = vmul.f32 %v839, %v895
    %v904 = vmul.f32 %v840, %v895
    %v905 = vmul.f32 %v841, %v895
    %v906 = vmul.f32 %v842, %v895
    %v907 = vmul.f32 %v843, %v895
    %v908 = vmul.f32 %v844, %v895
    %v909 = vmul.f32 %v845, %v895
    %v910 = vmul.f32 %v846, %v895
    %v911 = vmul.f32 %v847, %v895
    %v912 = vmul.f32 %v848, %v895
    %v913 = vld [vmem:[%s3] sm:$0x1]
    %v915 = vlaneseq
    %v916 = vshrl.u32 %v915, 7
    %v917 = vsub.s32 0, %v916
    %v918 = vrot.slane %v913, %v917
    %v920 = vadd.f32 %v897, %v918
    %v921 = vadd.f32 %v898, %v918
    %v922 = vadd.f32 %v899, %v918
    %v923 = vadd.f32 %v900, %v918
    %v924 = vadd.f32 %v901, %v918
    %v925 = vadd.f32 %v902, %v918
    %v926 = vadd.f32 %v903, %v918
    %v927 = vadd.f32 %v904, %v918
    %v928 = vadd.f32 %v905, %v918
    %v929 = vadd.f32 %v906, %v918
    %v930 = vadd.f32 %v907, %v918
    %v931 = vadd.f32 %v908, %v918
    %v932 = vadd.f32 %v909, %v918
    %v933 = vadd.f32 %v910, %v918
    %v934 = vadd.f32 %v911, %v918
    %v935 = vadd.f32 %v912, %v918
    %v936 = vmax.f32 %v920, 0.0
    %v937 = vmax.f32 %v921, 0.0
    %v938 = vmax.f32 %v922, 0.0
    %v939 = vmax.f32 %v923, 0.0
    %v940 = vmax.f32 %v924, 0.0
    %v941 = vmax.f32 %v925, 0.0
    %v942 = vmax.f32 %v926, 0.0
    %v943 = vmax.f32 %v927, 0.0
    %v944 = vmax.f32 %v928, 0.0
    %v945 = vmax.f32 %v929, 0.0
    %v946 = vmax.f32 %v930, 0.0
    %v947 = vmax.f32 %v931, 0.0
    %v948 = vmax.f32 %v932, 0.0
    %v949 = vmax.f32 %v933, 0.0
    %v950 = vmax.f32 %v934, 0.0
    %v951 = vmax.f32 %v935, 0.0
    %952 = vst [vmem:[#allocation2] sm:$0xff] %v936
    %953 = vst [vmem:[#allocation2 + $0x8] sm:$0xff] %v937
    %954 = vst [vmem:[#allocation2 + $0x10] sm:$0xff] %v938
    %955 = vst [vmem:[#allocation2 + $0x18] sm:$0xff] %v939
    %956 = vst [vmem:[#allocation2 + $0x20] sm:$0xff] %v940
    %957 = vst [vmem:[#allocation2 + $0x28] sm:$0xff] %v941
    %958 = vst [vmem:[#allocation2 + $0x30] sm:$0xff] %v942
    %959 = vst [vmem:[#allocation2 + $0x38] sm:$0xff] %v943
    %960 = vst [vmem:[#allocation2 + $0x40] sm:$0xff] %v944
    %961 = vst [vmem:[#allocation2 + $0x48] sm:$0xff] %v945
    %962 = vst [vmem:[#allocation2 + $0x50] sm:$0xff] %v946
    %963 = vst [vmem:[#allocation2 + $0x58] sm:$0xff] %v947
    %964 = vst [vmem:[#allocation2 + $0x60] sm:$0xff] %v948
    %965 = vst [vmem:[#allocation2 + $0x68] sm:$0xff] %v949
    %966 = vst [vmem:[#allocation2 + $0x70] sm:$0xff] %v950
    %967 = vst [vmem:[#allocation2 + $0x78] sm:$0xff] %v951
    // Predicated region
    $region18: #{tpu_custom_call.1} parent=1 // pred_check
      _
    $region19: #{tpu_custom_call.1} parent=1 // pred_check_branch
      %969 = sbr.rel (0) target = $region21
    $region20: #{tpu_custom_call.1} parent=1 // pred_region
      %s971 = ssub.s32 2048, 2048
      %972 = vsyncadd [#allocation3], %s971
      %s973 = sshll.u32 [#allocation2], 4
      %s974 = int_to_ptr.vmem [resolvable:$true] %s973
      %979 = dma.vmem_to_hbm [thread:$0]  %s974, 2048, %s4, [#allocation3], 128, 128, 8
    $region21: #{tpu_custom_call.1} parent=1 // pred_fallthru
      _
    // Predicated region
    $region22: #{tpu_custom_call.1} parent=1 // pred_check
      _
    $region23: #{tpu_custom_call.1} parent=1 // pred_check_branch
      %981 = sbr.rel (0) target = $region25
    $region24: #{tpu_custom_call.1} parent=1 // pred_region
      %982 = dma.done [#allocation3], 2048
    $region25: #{tpu_custom_call.1} parent=1 // pred_fallthru
      _
    %983 = vsyncpa [#allocation3], 1

</llo_original>
